<compile_context>
chip_gen: v7x
topology: tpu7x:2x2x1
jax: 0.10.0
libtpu: 0.0.40
codegen_flags: <defaults>
</compile_context>

<pallas_src>
import functools

import jax
import jax.numpy as jnp
from jax import lax
from jax.experimental import pallas as pl
from jax.experimental.pallas import tpu as pltpu

C1 = 0.01 ** 2  # (K1 * data_range)^2, data_range = 1.0
C2 = 0.03 ** 2


def _round_up(x, m):
    return (x + m - 1) // m * m


def _masked_ssim_kernel(p_ref, t_hbm, out_ref, tbuf, sem, acc_ref, *,
                        tm, h, w, spc, need_row_mask):
    c = pl.program_id(0)          # core-split index   ("parallel")
    j = pl.program_id(1)          # row-tile within it ("arbitrary")
    tile = c * spc + j
    slot = j & 1

    # ---- init: zero accumulators, kick off the DMA for this split's tile 0 --
    @pl.when(j == 0)
    def _():
        acc_ref[...] = jnp.zeros_like(acc_ref)
        out_ref[...] = jnp.zeros_like(out_ref)
        r0i = pl.multiple_of(tile * tm, 8)
        pltpu.make_async_copy(t_hbm.at[pl.ds(r0i, tm + 2), :],
                              tbuf.at[slot], sem.at[slot]).start()

    # ---- prefetch the next halo tile while this one is being computed -------
    @pl.when(j + 1 < spc)
    def _():
        nxt = 1 - slot
        r0n = pl.multiple_of((tile + 1) * tm, 8)
        pltpu.make_async_copy(t_hbm.at[pl.ds(r0n, tm + 2), :],
                              tbuf.at[nxt], sem.at[nxt]).start()

    # ---- wait for the current tile's halo DMA --------------------------------
    r0 = pl.multiple_of(tile * tm, 8)
    pltpu.make_async_copy(t_hbm.at[pl.ds(r0, tm + 2), :],
                          tbuf.at[slot], sem.at[slot]).wait()

    if need_row_mask:
        row_iota = lax.broadcasted_iota(jnp.int32, (8, w), 0)
        row_base = tile * tm

    zero = jnp.zeros((8, w), jnp.float32)
    a_n, a_p, a_t = zero, zero, zero
    a_p2, a_t2, a_pt = zero, zero, zero

    # ---- strip-fused compute: (8, w) bands, tiny live temporaries ------------
    for s in range(tm // 8):
        b0 = s * 8
        blk = tbuf[slot, b0:b0 + 10, :].astype(jnp.float32)   # (10, w+2) halo band
        ctr = blk[1:9, 1:w + 1]                               # original target rows
        vsum = blk[0:8, 1:w + 1] + blk[2:10, 1:w + 1]         # vertical neighbours
        hsum = blk[1:9, 0:w] + blk[1:9, 2:w + 2]              # horizontal (reflect cols)
        sharp = 5.0 * ctr - vsum - hsum                       # cv2 3x3 sharpening

        valid = ctr > 0.0                                     # mask on ORIGINAL target
        if need_row_mask:
            valid = jnp.logical_and(valid, (row_iota + (row_base + b0)) < h)

        pr = p_ref[b0:b0 + 8, :].astype(jnp.float32)
        pm = jnp.where(valid, pr, 0.0)
        tv = jnp.where(valid, sharp, 0.0)

        a_n = a_n + jnp.where(valid, 1.0, 0.0)
        a_p = a_p + pm
        a_t = a_t + tv
        a_p2 = a_p2 + pm * pm
        a_t2 = a_t2 + tv * tv
        a_pt = a_pt + pm * tv

    acc_ref[0:8, :] += a_n          # n
    acc_ref[8:16, :] += a_p         # sum(pred)
    acc_ref[16:24, :] += a_t        # sum(sharp)
    acc_ref[24:32, :] += a_p2       # sum(pred^2)
    acc_ref[32:40, :] += a_t2       # sum(sharp^2)
    acc_ref[40:48, :] += a_pt       # sum(pred*sharp)

    # ---- finalize: one cross-lane reduction, write 6 per-split partial sums --
    @pl.when(j == spc - 1)
    def _():
        def tot(q):
            return jnp.sum(acc_ref[8 * q:8 * (q + 1), :], keepdims=True)  # (1, 1)

        lane = lax.broadcasted_iota(jnp.int32, (8, 128), 1)
        vec = (jnp.where(lane == 0, tot(0), 0.0) +
               jnp.where(lane == 1, tot(1), 0.0) +
               jnp.where(lane == 2, tot(2), 0.0) +
               jnp.where(lane == 3, tot(3), 0.0) +
               jnp.where(lane == 4, tot(4), 0.0) +
               jnp.where(lane == 5, tot(5), 0.0))
        out_ref[0] = vec


def masked_ssim_loss(pred, target, *, block_rows=None):
    """pred, target: (N, C, H, W) with N == C == 1 (cv2 squeeze path)."""
    assert pred.shape == target.shape, "inconsistent dimensions"
    assert pred.ndim == 4 and pred.shape[0] == 1 and pred.shape[1] == 1, \
        "faithful cv2.filter2D-on-squeezed-array semantics require N=C=1"
    H, W = pred.shape[2], pred.shape[3]
    assert H >= 2 and W >= 2, "reflect-101 padding needs H, W >= 2"

    p2 = pred[0, 0]            # source dtype, no wrapper copy / pad
    t2 = target[0, 0]

    p_item = jnp.dtype(pred.dtype).itemsize
    t_item = jnp.dtype(target.dtype).itemsize

    if block_rows is None:
        # ~2 MiB per pred tile, multiple of 8, in [8, 256], capped by the image.
        tm = (2 * 1024 * 1024) // max(W * max(p_item, t_item), 1)
        tm = max(8, min(256, (tm // 8) * 8))
    else:
        tm = max(8, _round_up(block_rows, 8))
    TM = min(tm, _round_up(H, 8))

    nblocks = -(-H // TM)                     # row tiles covering the image
    n_split = 2 if nblocks >= 2 else 1        # v7x: one split per TensorCore
    spc = -(-nblocks // n_split)              # steps per split
    Hp = n_split * spc * TM
    need_row_mask = Hp > H

    # cv2 default border == BORDER_REFLECT_101 == jnp.pad mode="reflect".
    # Single fused 1-px reflect halo; zero rows only for grid alignment.
    t_src = jnp.pad(t2, ((1, 1), (1, 1)), mode="reflect")
    if Hp > H:
        t_src = jnp.pad(t_src, ((0, Hp - H), (0, 0)))
    # TODO(synk): a fully in-kernel reflect (clamped halo DMA + pl.when edge
    # fix-ups) would remove this remaining one-pass target copy as well.

    last_blk = nblocks - 1
    kernel = functools.partial(_masked_ssim_kernel, tm=TM, h=H, w=W, spc=spc,
                               need_row_mask=need_row_mask)

    vmem_need = (2 * (TM + 2) * (W + 2) * t_item      # target halo double buffer
                 + 2 * TM * W * p_item                 # pred double buffer
                 + 48 * W * 4 + 20 * 8 * W * 4)        # accumulators + strip temps
    vmem_limit = int(min(40 * 1024 * 1024, max(24 * 1024 * 1024, 3 * vmem_need)))

    partial = pl.pallas_call(
        kernel,
        out_shape=jax.ShapeDtypeStruct((n_split, 8, 128), jnp.float32),
        grid=(n_split, spc),
        in_specs=[
            pl.BlockSpec((TM, W),
                         lambda c, j: (jnp.minimum(c * spc + j, last_blk), 0)),
            pl.BlockSpec(memory_space=pl.ANY),        # target halo: manual DMA
        ],
        out_specs=pl.BlockSpec((1, 8, 128), lambda c, j: (c, 0, 0)),
        scratch_shapes=[
            pltpu.VMEM((2, TM + 2, W + 2), target.dtype),  # double-buffered halo
            pltpu.SemaphoreType.DMA((2,)),
            pltpu.VMEM((48, W), jnp.float32),              # 6 partial-sum slabs
        ],
        compiler_params=pltpu.CompilerParams(
            dimension_semantics=("parallel", "arbitrary"),
            vmem_limit_bytes=vmem_limit),
    )(p2, t_src)

    # 6-scalar combine + global-window SSIM over the masked pixels (plain JAX).
    s = jnp.sum(partial[:, 0, :6].astype(jnp.float32), axis=0)
    n = jnp.maximum(s[0], 1.0)       # empty-mask guard (reference would NaN)
    mu_p = s[1] / n
    mu_t = s[2] / n
    var_p = s[3] / n - mu_p * mu_p
    var_t = s[4] / n - mu_t * mu_t
    cov = s[5] / n - mu_p * mu_t
    ssim = ((2.0 * mu_p * mu_t + C1) * (2.0 * cov + C2)) / (
        (mu_p * mu_p + mu_t * mu_t + C1) * (var_p + var_t + C2))
    return (1.0 - ssim).astype(jnp.float32)


if __name__ == "__main__":
    key = jax.random.PRNGKey(0)
    kp, kt = jax.random.split(key)

    # N = C = 1 is required by the module's cv2 squeeze path.
    N, C, H, W = 1, 1, 16, 16
    pred = jax.random.uniform(kp, (N, C, H, W), dtype=jnp.float32)
    target = jax.random.uniform(kt, (N, C, H, W), dtype=jnp.float32)
    target = jnp.where(target > 0.3, target, 0.0)   # non-trivial valid mask

    loss = masked_ssim_loss(pred, target)
    jax.block_until_ready(loss)

    # Also exercise the multi-tile / two-way-split / ragged-row path.
    H2, W2 = 40, 16
    pred2 = jax.random.uniform(kp, (1, 1, H2, W2), dtype=jnp.float32)
    target2 = jax.random.uniform(kt, (1, 1, H2, W2), dtype=jnp.float32)
    target2 = jnp.where(target2 > 0.3, target2, 0.0)
    loss2 = masked_ssim_loss(pred2, target2, block_rows=8)
    jax.block_until_ready(loss2)

    print("KERNEL_OK")
</pallas_src>

<mosaic_0001>
module attributes {stable_mosaic.version = 11 : i64} {
  func.func @_masked_ssim_kernel(%arg0: i32, %arg1: i32, %arg2: memref<16x16xf32, #tpu.memory_space<vmem>>, %arg3: memref<18x18xf32, #tpu.memory_space<any>>, %arg4: memref<1x8x128xf32, #tpu.memory_space<vmem>>, %arg5: memref<2x18x18xf32, #tpu.memory_space<vmem>>, %arg6: memref<2x!tpu.dma_semaphore, #tpu.memory_space<semaphore_mem>>, %arg7: memref<48x16xf32, #tpu.memory_space<vmem>>) attributes {dimension_semantics = [#tpu.dimension_semantics<parallel>, #tpu.dimension_semantics<arbitrary>], iteration_bounds = array<i64: 1, 1>, scalar_prefetch = 0 : i64, scratch_operands = 3 : i64, tpu.core_type = #tpu.core_type<tc>, window_params = [{transform_indices = @transform_0, window_bounds = array<i64: 16, 16>}, {}, {transform_indices = @transform_2, window_bounds = array<i64: 1, 8, 128>}]} {
    %c1_i32 = arith.constant 1 : i32
    %0 = arith.muli %arg0, %c1_i32 : i32
    %1 = arith.addi %0, %arg1 : i32
    %c1_i32_0 = arith.constant 1 : i32
    %2 = arith.andi %arg1, %c1_i32_0 : i32
    %c0_i32 = arith.constant 0 : i32
    %3 = arith.cmpi eq, %arg1, %c0_i32 : i32
    %4 = arith.extui %3 : i1 to i32
    %c0_i32_1 = arith.constant 0 : i32
    %5 = arith.cmpi ne, %4, %c0_i32_1 : i32
    scf.if %5 {
      %cst_48 = arith.constant 0.000000e+00 : f32
      %105 = vector.broadcast %cst_48 : f32 to vector<48x16xf32>
      %c0_49 = arith.constant 0 : index
      %c0_50 = arith.constant 0 : index
      %106 = vector.load %arg7[%c0_49, %c0_50] : memref<48x16xf32, #tpu.memory_space<vmem>>, vector<48x16xf32>
      tpu.vector_store %arg7[%c0_49, %c0_50], %105 {strides = array<i32>} : memref<48x16xf32, #tpu.memory_space<vmem>>, vector<48x16xf32>,
      %cst_51 = arith.constant 0.000000e+00 : f32
      %107 = vector.broadcast %cst_51 : f32 to vector<1x8x128xf32>
      %c0_52 = arith.constant 0 : index
      %c0_53 = arith.constant 0 : index
      %c0_54 = arith.constant 0 : index
      %108 = vector.load %arg4[%c0_52, %c0_53, %c0_54] : memref<1x8x128xf32, #tpu.memory_space<vmem>>, vector<1x8x128xf32>
      tpu.vector_store %arg4[%c0_52, %c0_53, %c0_54], %107 {strides = array<i32>} : memref<1x8x128xf32, #tpu.memory_space<vmem>>, vector<1x8x128xf32>,
      %c16_i32_55 = arith.constant 16 : i32
      %109 = arith.muli %1, %c16_i32_55 : i32
      %110 = tpu.assume_multiple %109, 8 : i32
      %c0_i32_56 = arith.constant 0 : i32
      %111 = tpu.memref_slice %arg3[%110, %c0_i32_56] : memref<18x18xf32, #tpu.memory_space<any>> -> memref<18x18xf32, #tpu.memory_space<any>>
      %c0_i32_57 = arith.constant 0 : i32
      %c0_i32_58 = arith.constant 0 : i32
      %112 = tpu.memref_slice %arg5[%2, %c0_i32_57, %c0_i32_58] : memref<2x18x18xf32, #tpu.memory_space<vmem>> -> memref<1x18x18xf32, #tpu.memory_space<vmem>>
      %113 = tpu.memref_squeeze %112 : memref<1x18x18xf32, #tpu.memory_space<vmem>> -> memref<18x18xf32, #tpu.memory_space<vmem>>
      %114 = tpu.memref_slice %arg6[%2] : memref<2x!tpu.dma_semaphore, #tpu.memory_space<semaphore_mem>> -> memref<1x!tpu.dma_semaphore, #tpu.memory_space<semaphore_mem>>
      %115 = tpu.memref_squeeze %114 : memref<1x!tpu.dma_semaphore, #tpu.memory_space<semaphore_mem>> -> memref<!tpu.dma_semaphore, #tpu.memory_space<semaphore_mem>>
      tpu.enqueue_dma source(%111 : memref<18x18xf32, #tpu.memory_space<any>>) target(%113 : memref<18x18xf32, #tpu.memory_space<vmem>>) target_semaphore(%115 : memref<!tpu.dma_semaphore, #tpu.memory_space<semaphore_mem>>)
    } else {
    }
    %c1_i32_2 = arith.constant 1 : i32
    %6 = arith.addi %arg1, %c1_i32_2 : i32
    %c1_i32_3 = arith.constant 1 : i32
    %7 = arith.cmpi slt, %6, %c1_i32_3 : i32
    %8 = arith.extui %7 : i1 to i32
    %c0_i32_4 = arith.constant 0 : i32
    %9 = arith.cmpi ne, %8, %c0_i32_4 : i32
    scf.if %9 {
      %c1_i32_48 = arith.constant 1 : i32
      %105 = arith.subi %c1_i32_48, %2 : i32
      %c1_i32_49 = arith.constant 1 : i32
      %106 = arith.addi %1, %c1_i32_49 : i32
      %c16_i32_50 = arith.constant 16 : i32
      %107 = arith.muli %106, %c16_i32_50 : i32
      %108 = tpu.assume_multiple %107, 8 : i32
      %c0_i32_51 = arith.constant 0 : i32
      %109 = tpu.memref_slice %arg3[%108, %c0_i32_51] : memref<18x18xf32, #tpu.memory_space<any>> -> memref<18x18xf32, #tpu.memory_space<any>>
      %c0_i32_52 = arith.constant 0 : i32
      %c0_i32_53 = arith.constant 0 : i32
      %110 = tpu.memref_slice %arg5[%105, %c0_i32_52, %c0_i32_53] : memref<2x18x18xf32, #tpu.memory_space<vmem>> -> memref<1x18x18xf32, #tpu.memory_space<vmem>>
      %111 = tpu.memref_squeeze %110 : memref<1x18x18xf32, #tpu.memory_space<vmem>> -> memref<18x18xf32, #tpu.memory_space<vmem>>
      %112 = tpu.memref_slice %arg6[%105] : memref<2x!tpu.dma_semaphore, #tpu.memory_space<semaphore_mem>> -> memref<1x!tpu.dma_semaphore, #tpu.memory_space<semaphore_mem>>
      %113 = tpu.memref_squeeze %112 : memref<1x!tpu.dma_semaphore, #tpu.memory_space<semaphore_mem>> -> memref<!tpu.dma_semaphore, #tpu.memory_space<semaphore_mem>>
      tpu.enqueue_dma source(%109 : memref<18x18xf32, #tpu.memory_space<any>>) target(%111 : memref<18x18xf32, #tpu.memory_space<vmem>>) target_semaphore(%113 : memref<!tpu.dma_semaphore, #tpu.memory_space<semaphore_mem>>)
    } else {
    }
    %c16_i32 = arith.constant 16 : i32
    %10 = arith.muli %1, %c16_i32 : i32
    %11 = tpu.assume_multiple %10, 8 : i32
    %c0_i32_5 = arith.constant 0 : i32
    %12 = tpu.memref_slice %arg3[%11, %c0_i32_5] : memref<18x18xf32, #tpu.memory_space<any>> -> memref<18x18xf32, #tpu.memory_space<any>>
    %c0_i32_6 = arith.constant 0 : i32
    %c0_i32_7 = arith.constant 0 : i32
    %13 = tpu.memref_slice %arg5[%2, %c0_i32_6, %c0_i32_7] : memref<2x18x18xf32, #tpu.memory_space<vmem>> -> memref<1x18x18xf32, #tpu.memory_space<vmem>>
    %14 = tpu.memref_squeeze %13 : memref<1x18x18xf32, #tpu.memory_space<vmem>> -> memref<18x18xf32, #tpu.memory_space<vmem>>
    %15 = tpu.memref_slice %arg6[%2] : memref<2x!tpu.dma_semaphore, #tpu.memory_space<semaphore_mem>> -> memref<1x!tpu.dma_semaphore, #tpu.memory_space<semaphore_mem>>
    %16 = tpu.memref_squeeze %15 : memref<1x!tpu.dma_semaphore, #tpu.memory_space<semaphore_mem>> -> memref<!tpu.dma_semaphore, #tpu.memory_space<semaphore_mem>>
    tpu.wait_dma2 semaphore(%16 : memref<!tpu.dma_semaphore, #tpu.memory_space<semaphore_mem>>) src(%12 : memref<18x18xf32, #tpu.memory_space<any>>) dst(%14 : memref<18x18xf32, #tpu.memory_space<vmem>>)
    %cst = arith.constant 0.000000e+00 : f32
    %17 = vector.broadcast %cst : f32 to vector<8x16xf32>
    %18 = arith.index_cast %2 : i32 to index
    %c0 = arith.constant 0 : index
    %c0_8 = arith.constant 0 : index
    %19 = vector.load %arg5[%18, %c0, %c0_8] : memref<2x18x18xf32, #tpu.memory_space<vmem>>, vector<1x10x18xf32>
    %20 = vector.shape_cast %19 : vector<1x10x18xf32> to vector<10x18xf32>
    %21 = vector.extract_strided_slice %20 {offsets = [1, 1], sizes = [8, 16], strides = [1, 1]} : vector<10x18xf32> to vector<8x16xf32>
    %22 = vector.extract_strided_slice %20 {offsets = [0, 1], sizes = [8, 16], strides = [1, 1]} : vector<10x18xf32> to vector<8x16xf32>
    %23 = vector.extract_strided_slice %20 {offsets = [2, 1], sizes = [8, 16], strides = [1, 1]} : vector<10x18xf32> to vector<8x16xf32>
    %24 = arith.addf %22, %23 : vector<8x16xf32>
    %25 = vector.extract_strided_slice %20 {offsets = [1, 0], sizes = [8, 16], strides = [1, 1]} : vector<10x18xf32> to vector<8x16xf32>
    %26 = vector.extract_strided_slice %20 {offsets = [1, 2], sizes = [8, 16], strides = [1, 1]} : vector<10x18xf32> to vector<8x16xf32>
    %27 = arith.addf %25, %26 : vector<8x16xf32>
    %cst_9 = arith.constant 5.000000e+00 : f32
    %28 = vector.broadcast %cst_9 : f32 to vector<8x16xf32>
    %29 = arith.mulf %28, %21 : vector<8x16xf32>
    %30 = arith.subf %29, %24 : vector<8x16xf32>
    %31 = arith.subf %30, %27 : vector<8x16xf32>
    %cst_10 = arith.constant 0.000000e+00 : f32
    %32 = vector.broadcast %cst_10 : f32 to vector<8x16xf32>
    %33 = arith.cmpf ogt, %21, %32 : vector<8x16xf32>
    %c0_11 = arith.constant 0 : index
    %c0_12 = arith.constant 0 : index
    %34 = vector.load %arg2[%c0_11, %c0_12] : memref<16x16xf32, #tpu.memory_space<vmem>>, vector<8x16xf32>
    %cst_13 = arith.constant 0.000000e+00 : f32
    %35 = vector.broadcast %cst_13 : f32 to vector<8x16xf32>
    %36 = arith.select %33, %34, %35 : vector<8x16xi1>, vector<8x16xf32>
    %cst_14 = arith.constant 0.000000e+00 : f32
    %37 = vector.broadcast %cst_14 : f32 to vector<8x16xf32>
    %38 = arith.select %33, %31, %37 : vector<8x16xi1>, vector<8x16xf32>
    %cst_15 = arith.constant 1.000000e+00 : f32
    %cst_16 = arith.constant 0.000000e+00 : f32
    %39 = vector.broadcast %cst_15 : f32 to vector<8x16xf32>
    %40 = vector.broadcast %cst_16 : f32 to vector<8x16xf32>
    %41 = arith.select %33, %39, %40 : vector<8x16xi1>, vector<8x16xf32>
    %42 = arith.addf %17, %41 : vector<8x16xf32>
    %43 = arith.addf %17, %36 : vector<8x16xf32>
    %44 = arith.addf %17, %38 : vector<8x16xf32>
    %45 = arith.mulf %36, %36 : vector<8x16xf32>
    %46 = arith.addf %17, %45 : vector<8x16xf32>
    %47 = arith.mulf %38, %38 : vector<8x16xf32>
    %48 = arith.addf %17, %47 : vector<8x16xf32>
    %49 = arith.mulf %36, %38 : vector<8x16xf32>
    %50 = arith.addf %17, %49 : vector<8x16xf32>
    %51 = arith.index_cast %2 : i32 to index
    %c8 = arith.constant 8 : index
    %c0_17 = arith.constant 0 : index
    %52 = vector.load %arg5[%51, %c8, %c0_17] : memref<2x18x18xf32, #tpu.memory_space<vmem>>, vector<1x10x18xf32>
    %53 = vector.shape_cast %52 : vector<1x10x18xf32> to vector<10x18xf32>
    %54 = vector.extract_strided_slice %53 {offsets = [1, 1], sizes = [8, 16], strides = [1, 1]} : vector<10x18xf32> to vector<8x16xf32>
    %55 = vector.extract_strided_slice %53 {offsets = [0, 1], sizes = [8, 16], strides = [1, 1]} : vector<10x18xf32> to vector<8x16xf32>
    %56 = vector.extract_strided_slice %53 {offsets = [2, 1], sizes = [8, 16], strides = [1, 1]} : vector<10x18xf32> to vector<8x16xf32>
    %57 = arith.addf %55, %56 : vector<8x16xf32>
    %58 = vector.extract_strided_slice %53 {offsets = [1, 0], sizes = [8, 16], strides = [1, 1]} : vector<10x18xf32> to vector<8x16xf32>
    %59 = vector.extract_strided_slice %53 {offsets = [1, 2], sizes = [8, 16], strides = [1, 1]} : vector<10x18xf32> to vector<8x16xf32>
    %60 = arith.addf %58, %59 : vector<8x16xf32>
    %cst_18 = arith.constant 5.000000e+00 : f32
    %61 = vector.broadcast %cst_18 : f32 to vector<8x16xf32>
    %62 = arith.mulf %61, %54 : vector<8x16xf32>
    %63 = arith.subf %62, %57 : vector<8x16xf32>
    %64 = arith.subf %63, %60 : vector<8x16xf32>
    %cst_19 = arith.constant 0.000000e+00 : f32
    %65 = vector.broadcast %cst_19 : f32 to vector<8x16xf32>
    %66 = arith.cmpf ogt, %54, %65 : vector<8x16xf32>
    %c8_20 = arith.constant 8 : index
    %c0_21 = arith.constant 0 : index
    %67 = vector.load %arg2[%c8_20, %c0_21] : memref<16x16xf32, #tpu.memory_space<vmem>>, vector<8x16xf32>
    %cst_22 = arith.constant 0.000000e+00 : f32
    %68 = vector.broadcast %cst_22 : f32 to vector<8x16xf32>
    %69 = arith.select %66, %67, %68 : vector<8x16xi1>, vector<8x16xf32>
    %cst_23 = arith.constant 0.000000e+00 : f32
    %70 = vector.broadcast %cst_23 : f32 to vector<8x16xf32>
    %71 = arith.select %66, %64, %70 : vector<8x16xi1>, vector<8x16xf32>
    %cst_24 = arith.constant 1.000000e+00 : f32
    %cst_25 = arith.constant 0.000000e+00 : f32
    %72 = vector.broadcast %cst_24 : f32 to vector<8x16xf32>
    %73 = vector.broadcast %cst_25 : f32 to vector<8x16xf32>
    %74 = arith.select %66, %72, %73 : vector<8x16xi1>, vector<8x16xf32>
    %75 = arith.addf %42, %74 : vector<8x16xf32>
    %76 = arith.addf %43, %69 : vector<8x16xf32>
    %77 = arith.addf %44, %71 : vector<8x16xf32>
    %78 = arith.mulf %69, %69 : vector<8x16xf32>
    %79 = arith.addf %46, %78 : vector<8x16xf32>
    %80 = arith.mulf %71, %71 : vector<8x16xf32>
    %81 = arith.addf %48, %80 : vector<8x16xf32>
    %82 = arith.mulf %69, %71 : vector<8x16xf32>
    %83 = arith.addf %50, %82 : vector<8x16xf32>
    %c0_26 = arith.constant 0 : index
    %c0_27 = arith.constant 0 : index
    %84 = vector.load %arg7[%c0_26, %c0_27] : memref<48x16xf32, #tpu.memory_space<vmem>>, vector<8x16xf32>
    %85 = arith.addf %84, %75 : vector<8x16xf32>
    %c0_28 = arith.constant 0 : index
    %c0_29 = arith.constant 0 : index
    %86 = vector.load %arg7[%c0_28, %c0_29] : memref<48x16xf32, #tpu.memory_space<vmem>>, vector<8x16xf32>
    tpu.vector_store %arg7[%c0_28, %c0_29], %85 {strides = array<i32>} : memref<48x16xf32, #tpu.memory_space<vmem>>, vector<8x16xf32>,
    %c8_30 = arith.constant 8 : index
    %c0_31 = arith.constant 0 : index
    %87 = vector.load %arg7[%c8_30, %c0_31] : memref<48x16xf32, #tpu.memory_space<vmem>>, vector<8x16xf32>
    %88 = arith.addf %87, %76 : vector<8x16xf32>
    %c8_32 = arith.constant 8 : index
    %c0_33 = arith.constant 0 : index
    %89 = vector.load %arg7[%c8_32, %c0_33] : memref<48x16xf32, #tpu.memory_space<vmem>>, vector<8x16xf32>
    tpu.vector_store %arg7[%c8_32, %c0_33], %88 {strides = array<i32>} : memref<48x16xf32, #tpu.memory_space<vmem>>, vector<8x16xf32>,
    %c16 = arith.constant 16 : index
    %c0_34 = arith.constant 0 : index
    %90 = vector.load %arg7[%c16, %c0_34] : memref<48x16xf32, #tpu.memory_space<vmem>>, vector<8x16xf32>
    %91 = arith.addf %90, %77 : vector<8x16xf32>
    %c16_35 = arith.constant 16 : index
    %c0_36 = arith.constant 0 : index
    %92 = vector.load %arg7[%c16_35, %c0_36] : memref<48x16xf32, #tpu.memory_space<vmem>>, vector<8x16xf32>
    tpu.vector_store %arg7[%c16_35, %c0_36], %91 {strides = array<i32>} : memref<48x16xf32, #tpu.memory_space<vmem>>, vector<8x16xf32>,
    %c24 = arith.constant 24 : index
    %c0_37 = arith.constant 0 : index
    %93 = vector.load %arg7[%c24, %c0_37] : memref<48x16xf32, #tpu.memory_space<vmem>>, vector<8x16xf32>
    %94 = arith.addf %93, %79 : vector<8x16xf32>
    %c24_38 = arith.constant 24 : index
    %c0_39 = arith.constant 0 : index
    %95 = vector.load %arg7[%c24_38, %c0_39] : memref<48x16xf32, #tpu.memory_space<vmem>>, vector<8x16xf32>
    tpu.vector_store %arg7[%c24_38, %c0_39], %94 {strides = array<i32>} : memref<48x16xf32, #tpu.memory_space<vmem>>, vector<8x16xf32>,
    %c32 = arith.constant 32 : index
    %c0_40 = arith.constant 0 : index
    %96 = vector.load %arg7[%c32, %c0_40] : memref<48x16xf32, #tpu.memory_space<vmem>>, vector<8x16xf32>
    %97 = arith.addf %96, %81 : vector<8x16xf32>
    %c32_41 = arith.constant 32 : index
    %c0_42 = arith.constant 0 : index
    %98 = vector.load %arg7[%c32_41, %c0_42] : memref<48x16xf32, #tpu.memory_space<vmem>>, vector<8x16xf32>
    tpu.vector_store %arg7[%c32_41, %c0_42], %97 {strides = array<i32>} : memref<48x16xf32, #tpu.memory_space<vmem>>, vector<8x16xf32>,
    %c40 = arith.constant 40 : index
    %c0_43 = arith.constant 0 : index
    %99 = vector.load %arg7[%c40, %c0_43] : memref<48x16xf32, #tpu.memory_space<vmem>>, vector<8x16xf32>
    %100 = arith.addf %99, %83 : vector<8x16xf32>
    %c40_44 = arith.constant 40 : index
    %c0_45 = arith.constant 0 : index
    %101 = vector.load %arg7[%c40_44, %c0_45] : memref<48x16xf32, #tpu.memory_space<vmem>>, vector<8x16xf32>
    tpu.vector_store %arg7[%c40_44, %c0_45], %100 {strides = array<i32>} : memref<48x16xf32, #tpu.memory_space<vmem>>, vector<8x16xf32>,
    %c0_i32_46 = arith.constant 0 : i32
    %102 = arith.cmpi eq, %arg1, %c0_i32_46 : i32
    %103 = arith.extui %102 : i1 to i32
    %c0_i32_47 = arith.constant 0 : i32
    %104 = arith.cmpi ne, %103, %c0_i32_47 : i32
    scf.if %104 {
      %105 = tpu.iota {dimensions = array<i32: 1>} : vector<8x128xi32>
      %c0_i32_48 = arith.constant 0 : i32
      %106 = vector.broadcast %c0_i32_48 : i32 to vector<8x128xi32>
      %107 = arith.cmpi eq, %105, %106 : vector<8x128xi32>
      %c0_49 = arith.constant 0 : index
      %c0_50 = arith.constant 0 : index
      %108 = vector.load %arg7[%c0_49, %c0_50] : memref<48x16xf32, #tpu.memory_space<vmem>>, vector<8x16xf32>
      %109 = vector.shape_cast %108 : vector<8x16xf32> to vector<1x8x16xf32>
      %cst_51 = arith.constant dense<0.000000e+00> : vector<1xf32>
      %110 = vector.multi_reduction <add>, %109, %cst_51 [1, 2] : vector<1x8x16xf32> to vector<1xf32>
      %111 = vector.shape_cast %110 : vector<1xf32> to vector<1x1x1xf32>
      %112 = vector.extract %111[0, 0, 0] : f32 from vector<1x1x1xf32>
      %113 = vector.broadcast %112 : f32 to vector<1x1xf32>
      %cst_52 = arith.constant 0.000000e+00 : f32
      %114 = vector.shape_cast %113 : vector<1x1xf32> to vector<1x1xf32>
      %115 = vector.broadcast %114 : vector<1x1xf32> to vector<8x128xf32>
      %116 = vector.broadcast %cst_52 : f32 to vector<8x128xf32>
      %117 = arith.select %107, %115, %116 : vector<8x128xi1>, vector<8x128xf32>
      %c1_i32_53 = arith.constant 1 : i32
      %118 = vector.broadcast %c1_i32_53 : i32 to vector<8x128xi32>
      %119 = arith.cmpi eq, %105, %118 : vector<8x128xi32>
      %c8_54 = arith.constant 8 : index
      %c0_55 = arith.constant 0 : index
      %120 = vector.load %arg7[%c8_54, %c0_55] : memref<48x16xf32, #tpu.memory_space<vmem>>, vector<8x16xf32>
      %121 = vector.shape_cast %120 : vector<8x16xf32> to vector<1x8x16xf32>
      %cst_56 = arith.constant dense<0.000000e+00> : vector<1xf32>
      %122 = vector.multi_reduction <add>, %121, %cst_56 [1, 2] : vector<1x8x16xf32> to vector<1xf32>
      %123 = vector.shape_cast %122 : vector<1xf32> to vector<1x1x1xf32>
      %124 = vector.extract %123[0, 0, 0] : f32 from vector<1x1x1xf32>
      %125 = vector.broadcast %124 : f32 to vector<1x1xf32>
      %cst_57 = arith.constant 0.000000e+00 : f32
      %126 = vector.shape_cast %125 : vector<1x1xf32> to vector<1x1xf32>
      %127 = vector.broadcast %126 : vector<1x1xf32> to vector<8x128xf32>
      %128 = vector.broadcast %cst_57 : f32 to vector<8x128xf32>
      %129 = arith.select %119, %127, %128 : vector<8x128xi1>, vector<8x128xf32>
      %130 = arith.addf %117, %129 : vector<8x128xf32>
      %c2_i32 = arith.constant 2 : i32
      %131 = vector.broadcast %c2_i32 : i32 to vector<8x128xi32>
      %132 = arith.cmpi eq, %105, %131 : vector<8x128xi32>
      %c16_58 = arith.constant 16 : index
      %c0_59 = arith.constant 0 : index
      %133 = vector.load %arg7[%c16_58, %c0_59] : memref<48x16xf32, #tpu.memory_space<vmem>>, vector<8x16xf32>
      %134 = vector.shape_cast %133 : vector<8x16xf32> to vector<1x8x16xf32>
      %cst_60 = arith.constant dense<0.000000e+00> : vector<1xf32>
      %135 = vector.multi_reduction <add>, %134, %cst_60 [1, 2] : vector<1x8x16xf32> to vector<1xf32>
      %136 = vector.shape_cast %135 : vector<1xf32> to vector<1x1x1xf32>
      %137 = vector.extract %136[0, 0, 0] : f32 from vector<1x1x1xf32>
      %138 = vector.broadcast %137 : f32 to vector<1x1xf32>
      %cst_61 = arith.constant 0.000000e+00 : f32
      %139 = vector.shape_cast %138 : vector<1x1xf32> to vector<1x1xf32>
      %140 = vector.broadcast %139 : vector<1x1xf32> to vector<8x128xf32>
      %141 = vector.broadcast %cst_61 : f32 to vector<8x128xf32>
      %142 = arith.select %132, %140, %141 : vector<8x128xi1>, vector<8x128xf32>
      %143 = arith.addf %130, %142 : vector<8x128xf32>
      %c3_i32 = arith.constant 3 : i32
      %144 = vector.broadcast %c3_i32 : i32 to vector<8x128xi32>
      %145 = arith.cmpi eq, %105, %144 : vector<8x128xi32>
      %c24_62 = arith.constant 24 : index
      %c0_63 = arith.constant 0 : index
      %146 = vector.load %arg7[%c24_62, %c0_63] : memref<48x16xf32, #tpu.memory_space<vmem>>, vector<8x16xf32>
      %147 = vector.shape_cast %146 : vector<8x16xf32> to vector<1x8x16xf32>
      %cst_64 = arith.constant dense<0.000000e+00> : vector<1xf32>
      %148 = vector.multi_reduction <add>, %147, %cst_64 [1, 2] : vector<1x8x16xf32> to vector<1xf32>
      %149 = vector.shape_cast %148 : vector<1xf32> to vector<1x1x1xf32>
      %150 = vector.extract %149[0, 0, 0] : f32 from vector<1x1x1xf32>
      %151 = vector.broadcast %150 : f32 to vector<1x1xf32>
      %cst_65 = arith.constant 0.000000e+00 : f32
      %152 = vector.shape_cast %151 : vector<1x1xf32> to vector<1x1xf32>
      %153 = vector.broadcast %152 : vector<1x1xf32> to vector<8x128xf32>
      %154 = vector.broadcast %cst_65 : f32 to vector<8x128xf32>
      %155 = arith.select %145, %153, %154 : vector<8x128xi1>, vector<8x128xf32>
      %156 = arith.addf %143, %155 : vector<8x128xf32>
      %c4_i32 = arith.constant 4 : i32
      %157 = vector.broadcast %c4_i32 : i32 to vector<8x128xi32>
      %158 = arith.cmpi eq, %105, %157 : vector<8x128xi32>
      %c32_66 = arith.constant 32 : index
      %c0_67 = arith.constant 0 : index
      %159 = vector.load %arg7[%c32_66, %c0_67] : memref<48x16xf32, #tpu.memory_space<vmem>>, vector<8x16xf32>
      %160 = vector.shape_cast %159 : vector<8x16xf32> to vector<1x8x16xf32>
      %cst_68 = arith.constant dense<0.000000e+00> : vector<1xf32>
      %161 = vector.multi_reduction <add>, %160, %cst_68 [1, 2] : vector<1x8x16xf32> to vector<1xf32>
      %162 = vector.shape_cast %161 : vector<1xf32> to vector<1x1x1xf32>
      %163 = vector.extract %162[0, 0, 0] : f32 from vector<1x1x1xf32>
      %164 = vector.broadcast %163 : f32 to vector<1x1xf32>
      %cst_69 = arith.constant 0.000000e+00 : f32
      %165 = vector.shape_cast %164 : vector<1x1xf32> to vector<1x1xf32>
      %166 = vector.broadcast %165 : vector<1x1xf32> to vector<8x128xf32>
      %167 = vector.broadcast %cst_69 : f32 to vector<8x128xf32>
      %168 = arith.select %158, %166, %167 : vector<8x128xi1>, vector<8x128xf32>
      %169 = arith.addf %156, %168 : vector<8x128xf32>
      %c5_i32 = arith.constant 5 : i32
      %170 = vector.broadcast %c5_i32 : i32 to vector<8x128xi32>
      %171 = arith.cmpi eq, %105, %170 : vector<8x128xi32>
      %c40_70 = arith.constant 40 : index
      %c0_71 = arith.constant 0 : index
      %172 = vector.load %arg7[%c40_70, %c0_71] : memref<48x16xf32, #tpu.memory_space<vmem>>, vector<8x16xf32>
      %173 = vector.shape_cast %172 : vector<8x16xf32> to vector<1x8x16xf32>
      %cst_72 = arith.constant dense<0.000000e+00> : vector<1xf32>
      %174 = vector.multi_reduction <add>, %173, %cst_72 [1, 2] : vector<1x8x16xf32> to vector<1xf32>
      %175 = vector.shape_cast %174 : vector<1xf32> to vector<1x1x1xf32>
      %176 = vector.extract %175[0, 0, 0] : f32 from vector<1x1x1xf32>
      %177 = vector.broadcast %176 : f32 to vector<1x1xf32>
      %cst_73 = arith.constant 0.000000e+00 : f32
      %178 = vector.shape_cast %177 : vector<1x1xf32> to vector<1x1xf32>
      %179 = vector.broadcast %178 : vector<1x1xf32> to vector<8x128xf32>
      %180 = vector.broadcast %cst_73 : f32 to vector<8x128xf32>
      %181 = arith.select %171, %179, %180 : vector<8x128xi1>, vector<8x128xf32>
      %182 = arith.addf %169, %181 : vector<8x128xf32>
      %c0_74 = arith.constant 0 : index
      %c0_75 = arith.constant 0 : index
      %c0_76 = arith.constant 0 : index
      %183 = vector.load %arg4[%c0_74, %c0_75, %c0_76] : memref<1x8x128xf32, #tpu.memory_space<vmem>>, vector<1x8x128xf32>
      %184 = vector.shape_cast %183 : vector<1x8x128xf32> to vector<8x128xf32>
      %185 = vector.shape_cast %182 : vector<8x128xf32> to vector<1x8x128xf32>
      tpu.vector_store %arg4[%c0_74, %c0_75, %c0_76], %185 {strides = array<i32>} : memref<1x8x128xf32, #tpu.memory_space<vmem>>, vector<1x8x128xf32>,
    } else {
    }
    return
  }
  func.func @transform_0(%arg0: i32, %arg1: i32) -> (i32, i32) {
    %c1_i32 = arith.constant 1 : i32
    %0 = arith.muli %arg0, %c1_i32 : i32
    %1 = arith.addi %0, %arg1 : i32
    %c0_i32 = arith.constant 0 : i32
    %2 = arith.minsi %1, %c0_i32 : i32
    %c0_i32_0 = arith.constant 0 : i32
    %c0_i32_1 = arith.constant 0 : i32
    return %2, %c0_i32_0 : i32, i32
  }
  func.func @transform_2(%arg0: i32, %arg1: i32) -> (i32, i32, i32) {
    %c0_i32 = arith.constant 0 : i32
    %c0_i32_0 = arith.constant 0 : i32
    %c0_i32_1 = arith.constant 0 : i32
    return %arg0, %c0_i32, %c0_i32_0 : i32, i32, i32
  }
}

</mosaic_0001>

<llo_original>
// kernel: tpu_custom_call.1
$region0: #{tpu_custom_call.1}
  #allocation0 [shape = 'u32[]', space=smem, size = 0x4, offset = 0x4, fixed_abs, tag = 'smem constant byte address 0x4 - core index']
  #allocation1 [shape = 'u32[144,128]{1,0:T(1,128)}', space=vmem, size = 0x12000, scoped, tag = 'internal scratch']
  #allocation2 [shape = 'f32[2,18,18]{2,1,0:T(8,128)}', space=vmem, size = 0x6000, scoped, tag = 'scratch operand']
  #allocation3 [shape = 's32[2]{0}', space=sflag, size = 0x8, scoped, tag = 'scratch operand']
  #allocation4 [shape = 'f32[48,16]{1,0:T(8,128)}', space=vmem, size = 0x6000, scoped, tag = 'scratch operand']
  #allocation9 [shape = 's32[]', space=sflag, size = 0x4, offset = 0, fixed_abs, tag = 'sflag constant byte address 0x0 - dummy sync flag']
  #allocation10 [shape = 's32[]', space=sflag, size = 0x4, offset = 0, fixed_abs, tag = 'sflag constant byte address 0x0 - dummy sync flag']
  #allocation11 [shape = 'u32[]', space=smem, size = 0x4, offset = 0x44, fixed_abs, tag = 'smem constant byte address 0x44 - assertion arg 0']
  #allocation12 [shape = 'u32[]', space=smem, size = 0x4, offset = 0x48, fixed_abs, tag = 'smem constant byte address 0x48 - assertion arg 1']
  #allocation13 [shape = 's32[]', space=sflag, size = 0x4, offset = 0, fixed_abs, tag = 'sflag constant byte address 0x0 - dummy sync flag']
  #allocation14 [shape = 's32[]', space=sflag, size = 0x4, offset = 0, fixed_abs, tag = 'sflag constant byte address 0x0 - dummy sync flag']
  %s0 = inlined_call_operand.hbm [shape: f32[16,16], index: 0, kind: input, shape index: {}]
  %s1 = inlined_call_operand.hbm [shape: f32[18,18], index: 1, kind: input, shape index: {}]
  %s2 = inlined_call_operand.hbm [shape: f32[1,8,128], index: 2, kind: output, shape index: {}]
  %s3 = sld [smem:[#allocation0]]
  $region38: #{tpu_custom_call.1} parent=0
    _
  %s5 = ssub.s32 1, %s3
  %s6 = scalar_select 0, %s5, %s3
  $region1: #{tpu_custom_call.1} parent=0
    #allocation5 [shape = 'u8[8192]{0}', space=vmem, size = 0x2000, scoped, tag = 'input window, operand 0, single buffered']
    #allocation6 [shape = 's32[1]{0}', space=sflag, size = 0x4, scoped, tag = 'scoped memory for tpu_custom_call.1']
    #allocation7 [shape = 's32[1]{0}', space=sflag, size = 0x4, scoped, tag = 'scoped memory for tpu_custom_call.1']
    #allocation8 [shape = 'u8[4096]{0}', space=vmem, size = 0x1000, scoped, tag = 'output window, operand 0, single buffered']
    %7 = vsyncpa [#allocation6], 0
    %8 = vsyncpa [#allocation7], 0
    // Predicated region
    $region2: #{tpu_custom_call.1} parent=1 // pred_check
      _
    $region3: #{tpu_custom_call.1} parent=1 // pred_check_branch
      %10 = sbr.rel (0) target = $region5
    $region4: #{tpu_custom_call.1} parent=1 // pred_region
      %s11 = sadd.s32 0, 0
      %p12 = scmp.lt.s32.totalorder %s11, 0
      %s13 = scalar_select %p12, %s11, 0
      %s14 = smul.u32 2, %s13
      %s16 = ssub.s32 256, 256
      %17 = vsyncadd [#allocation6], %s16
      %s18 = smul.addr %s14, 128
      %s19 = scalar_lea.hbm %s0, %s18
      %s20 = sshll.u32 [#allocation5], 4
      %s21 = int_to_ptr.vmem [resolvable:$true] %s20
      %26 = dma.hbm_to_vmem [thread:$0]  %s19, 256, %s21, [#allocation6], 128, 128, 8
    $region5: #{tpu_custom_call.1} parent=1 // pred_fallthru
      _
    // Predicated region
    $region6: #{tpu_custom_call.1} parent=1 // pred_check
      _
    $region7: #{tpu_custom_call.1} parent=1 // pred_check_branch
      %28 = sbr.rel (0) target = $region9
    $region8: #{tpu_custom_call.1} parent=1 // pred_region
      %29 = dma.done [#allocation6], 256
    $region9: #{tpu_custom_call.1} parent=1 // pred_fallthru
      _
    %s30 = sadd.s32 0, 0
    %p31 = scmp.lt.s32.totalorder %s30, 0
    %s32 = scalar_select %p31, %s30, 0
    %s33 = smul.u32 2, %s32
    %s34 = sadd.s32 0, 0
    %s35 = sand.u32 0, 1
    %p36 = scmp.eq.s32.totalorder 0, 0
    // Predicated region
    $region10: #{tpu_custom_call.1} parent=1 // pred_check
      %p37 = pneg %p36
    $region11: #{tpu_custom_call.1} parent=1 // pred_check_branch
      %39 = sbr.rel (%p37) target = $region13
    $region12: #{tpu_custom_call.1} parent=1 // pred_region
      %vm40 = vcmask 130048
      %41 = vst.msk [vmem:[#allocation4] sm:$0xff] %vm40, 0.0
      %42 = vst.msk [vmem:[#allocation4 + $0x8] sm:$0xff] %vm40, 0.0
      %43 = vst.msk [vmem:[#allocation4 + $0x10] sm:$0xff] %vm40, 0.0
      %44 = vst.msk [vmem:[#allocation4 + $0x18] sm:$0xff] %vm40, 0.0
      %45 = vst.msk [vmem:[#allocation4 + $0x20] sm:$0xff] %vm40, 0.0
      %46 = vst.msk [vmem:[#allocation4 + $0x28] sm:$0xff] %vm40, 0.0
      %47 = vst [vmem:[#allocation8] sm:$0xff] 0.0
      %s48 = smul.u32 %s34, 16
      %s49 = smul.addr %s48, 16
      %s50 = scalar_lea.hbm %s1, %s49
      %s51 = smul.u32 %s35, 24
      %s52 = scalar_lea.vmem [#allocation2], %s51
      %s53 = scalar_lea.sflag [#allocation3], %s35
      // Predicated region
      $region14: #{tpu_custom_call.1} parent=12 // pred_check
        _
      $region15: #{tpu_custom_call.1} parent=12 // pred_check_branch
        %55 = sbr.rel target = $region17
      $region16: #{tpu_custom_call.1} parent=12 // pred_region
        %56 = sst [smem:[#allocation11]] [#allocation10]
        %57 = sst [smem:[#allocation12]] [#allocation9]
      $region17: #{tpu_custom_call.1} parent=12 // pred_fallthru
        _
      %59 = shalt.err (0)
      %s61 = sshll.u32 %s52, 4
      %s62 = int_to_ptr.vmem [resolvable:$true] %s61
      %64 = dma.hbm_to_vmem [thread:$0]  %s50, 288, %s62, %s53
    $region13: #{tpu_custom_call.1} parent=1 // pred_fallthru
      _
    %s65 = sadd.s32 0, 1
    %p66 = scmp.lt.s32.totalorder %s65, 1
    // Predicated region
    $region18: #{tpu_custom_call.1} parent=1 // pred_check
      %p67 = pneg %p66
    $region19: #{tpu_custom_call.1} parent=1 // pred_check_branch
      %69 = sbr.rel (%p67) target = $region21
    $region20: #{tpu_custom_call.1} parent=1 // pred_region
      %s70 = ssub.s32 1, %s35
      %s71 = sadd.s32 %s34, 1
      %s72 = smul.u32 %s71, 16
      %s73 = smul.addr %s72, 16
      %s74 = scalar_lea.hbm %s1, %s73
      %s75 = smul.u32 %s70, 24
      %s76 = scalar_lea.vmem [#allocation2], %s75
      %s77 = scalar_lea.sflag [#allocation3], %s70
      // Predicated region
      $region22: #{tpu_custom_call.1} parent=20 // pred_check
        _
      $region23: #{tpu_custom_call.1} parent=20 // pred_check_branch
        %79 = sbr.rel target = $region25
      $region24: #{tpu_custom_call.1} parent=20 // pred_region
        %80 = sst [smem:[#allocation11]] [#allocation14]
        %81 = sst [smem:[#allocation12]] [#allocation13]
      $region25: #{tpu_custom_call.1} parent=20 // pred_fallthru
        _
      %83 = shalt.err (0)
      %s85 = sshll.u32 %s76, 4
      %s86 = int_to_ptr.vmem [resolvable:$true] %s85
      %88 = dma.hbm_to_vmem [thread:$0]  %s74, 288, %s86, %s77
    $region21: #{tpu_custom_call.1} parent=1 // pred_fallthru
      _
    %s89 = smul.u32 %s34, 16
    %s90 = scalar_lea.sflag [#allocation3], %s35
    %s91 = smul.u32 18, 1
    %s92 = sshll.u32 %s91, 4
    %93 = dma.done %s90, %s92
    %s94 = smul.u32 %s35, 24
    %s95 = scalar_lea.vmem [#allocation2], %s94
    %v96 = vld [vmem:[%s95] sm:$0xff]
    %v97 = vld [vmem:[%s95 + $0x8] sm:$0x3]
    %vm100 = vcmask 1045504
    %v101 = vrot.slane %v96, 2
    %v102 = vrot.slane %v97, 2
    %v103 = vsel %vm100, %v101, %v102
    %v105 = vadd.f32 %v96, %v103
    %106 = vrot.lane.b32.xlu0 %v96, 126
    %v107 = vpop.permute.xlu0 %106
    %108 = vrot.lane.b32.xlu0 %v97, 126
    %v109 = vpop.permute.xlu0 %108
    %v112 = vadd.f32 %v96, %v107
    %v113 = vadd.f32 %v97, %v109
    %v114 = vmul.f32 %v96, 5.0
    %v115 = vmul.f32 %v97, 5.0
    %v117 = vrot.slane %v105, 7
    %v119 = vsub.f32 %v114, %v117
    %v120 = vsub.f32 %v115, %v117
    %123 = vrot.lane.b32.xlu0 %v112, 1
    %v124 = vpop.permute.xlu0 %123
    %125 = vrot.lane.b32.xlu0 %v113, 1
    %v126 = vpop.permute.xlu0 %125
    %v129 = vsub.f32 %v119, %v124
    %v130 = vsub.f32 %v120, %v126
    %vm131 = vcmp.gt.f32.partialorder %v96, 0.0
    %vm132 = vcmp.gt.f32.partialorder %v97, 0.0
    %v133 = vld [vmem:[#allocation5] sm:$0xff]
    %v135 = vrot.slane %v133, 7
    %136 = vrot.lane.b32.xlu0 %v135, 1
    %v137 = vpop.permute.xlu0 %136
    %v139 = vsel %vm131, %v137, 0.0
    %v140 = vsel %vm132, %v137, 0.0
    %v141 = vsel %vm131, %v129, 0.0
    %v142 = vsel %vm132, %v130, 0.0
    %v143 = vsel %vm131, 1.0, 0.0
    %v144 = vsel %vm132, 1.0, 0.0
    %v145 = vadd.f32 %v143, 0.0
    %v146 = vadd.f32 %v144, 0.0
    %v147 = vadd.f32 %v139, 0.0
    %v148 = vadd.f32 %v140, 0.0
    %v149 = vadd.f32 %v141, 0.0
    %v150 = vadd.f32 %v142, 0.0
    %v151 = vmul.f32 %v139, %v139
    %v152 = vmul.f32 %v140, %v140
    %v153 = vadd.f32 %v151, 0.0
    %v154 = vadd.f32 %v152, 0.0
    %v155 = vmul.f32 %v141, %v141
    %v156 = vmul.f32 %v142, %v142
    %v157 = vadd.f32 %v155, 0.0
    %v158 = vadd.f32 %v156, 0.0
    %v159 = vmul.f32 %v139, %v141
    %v160 = vmul.f32 %v140, %v142
    %v161 = vadd.f32 %v159, 0.0
    %v162 = vadd.f32 %v160, 0.0
    %v163 = vld [vmem:[%s95 + $0x8] sm:$0xff]
    %v164 = vld [vmem:[%s95 + $0x10] sm:$0x3]
    %v167 = vrot.slane %v163, 2
    %v168 = vrot.slane %v164, 2
    %v169 = vsel %vm100, %v167, %v168
    %v171 = vadd.f32 %v163, %v169
    %172 = vrot.lane.b32.xlu0 %v163, 126
    %v173 = vpop.permute.xlu0 %172
    %174 = vrot.lane.b32.xlu0 %v164, 126
    %v175 = vpop.permute.xlu0 %174
    %v178 = vadd.f32 %v163, %v173
    %v179 = vadd.f32 %v164, %v175
    %v180 = vmul.f32 %v163, 5.0
    %v181 = vmul.f32 %v164, 5.0
    %v183 = vrot.slane %v171, 7
    %v185 = vsub.f32 %v180, %v183
    %v186 = vsub.f32 %v181, %v183
    %189 = vrot.lane.b32.xlu0 %v178, 1
    %v190 = vpop.permute.xlu0 %189
    %191 = vrot.lane.b32.xlu0 %v179, 1
    %v192 = vpop.permute.xlu0 %191
    %v195 = vsub.f32 %v185, %v190
    %v196 = vsub.f32 %v186, %v192
    %vm197 = vcmp.gt.f32.partialorder %v163, 0.0
    %vm198 = vcmp.gt.f32.partialorder %v164, 0.0
    %v199 = vld [vmem:[#allocation5 + $0x8] sm:$0xff]
    %v201 = vrot.slane %v199, 7
    %202 = vrot.lane.b32.xlu0 %v201, 1
    %v203 = vpop.permute.xlu0 %202
    %v205 = vsel %vm197, %v203, 0.0
    %v206 = vsel %vm198, %v203, 0.0
    %v207 = vsel %vm197, %v195, 0.0
    %v208 = vsel %vm198, %v196, 0.0
    %v209 = vsel %vm197, 1.0, 0.0
    %v210 = vsel %vm198, 1.0, 0.0
    %v211 = vadd.f32 %v145, %v209
    %v212 = vadd.f32 %v146, %v210
    %v213 = vadd.f32 %v147, %v205
    %v214 = vadd.f32 %v148, %v206
    %v215 = vadd.f32 %v149, %v207
    %v216 = vadd.f32 %v150, %v208
    %v217 = vmul.f32 %v205, %v205
    %v218 = vmul.f32 %v206, %v206
    %v219 = vadd.f32 %v153, %v217
    %v220 = vadd.f32 %v154, %v218
    %v221 = vmul.f32 %v207, %v207
    %v222 = vmul.f32 %v208, %v208
    %v223 = vadd.f32 %v157, %v221
    %v224 = vadd.f32 %v158, %v222
    %v225 = vmul.f32 %v205, %v207
    %v226 = vmul.f32 %v206, %v208
    %v227 = vadd.f32 %v161, %v225
    %v228 = vadd.f32 %v162, %v226
    %v229 = vld [vmem:[#allocation4] sm:$0xff]
    %vm232 = vcmask 1046528
    %v233 = vrot.slane %v211, 1
    %v234 = vrot.slane %v212, 1
    %v235 = vsel %vm232, %v233, %v234
    %236 = vrot.lane.b32.xlu0 %v235, 127
    %v237 = vpop.permute.xlu0 %236
    %v239 = vadd.f32 %v229, %v237
    %vm240 = vcmask 130048
    %241 = vst.msk [vmem:[#allocation4] sm:$0xff] %vm240, %v239
    %v242 = vld [vmem:[#allocation4 + $0x8] sm:$0xff]
    %v245 = vrot.slane %v213, 1
    %v246 = vrot.slane %v214, 1
    %v247 = vsel %vm232, %v245, %v246
    %248 = vrot.lane.b32.xlu0 %v247, 127
    %v249 = vpop.permute.xlu0 %248
    %v251 = vadd.f32 %v242, %v249
    %252 = vst.msk [vmem:[#allocation4 + $0x8] sm:$0xff] %vm240, %v251
    %v253 = vld [vmem:[#allocation4 + $0x10] sm:$0xff]
    %v256 = vrot.slane %v215, 1
    %v257 = vrot.slane %v216, 1
    %v258 = vsel %vm232, %v256, %v257
    %259 = vrot.lane.b32.xlu0 %v258, 127
    %v260 = vpop.permute.xlu0 %259
    %v262 = vadd.f32 %v253, %v260
    %263 = vst.msk [vmem:[#allocation4 + $0x10] sm:$0xff] %vm240, %v262
    %v264 = vld [vmem:[#allocation4 + $0x18] sm:$0xff]
    %v267 = vrot.slane %v219, 1
    %v268 = vrot.slane %v220, 1
    %v269 = vsel %vm232, %v267, %v268
    %270 = vrot.lane.b32.xlu0 %v269, 127
    %v271 = vpop.permute.xlu0 %270
    %v273 = vadd.f32 %v264, %v271
    %274 = vst.msk [vmem:[#allocation4 + $0x18] sm:$0xff] %vm240, %v273
    %v275 = vld [vmem:[#allocation4 + $0x20] sm:$0xff]
    %v278 = vrot.slane %v223, 1
    %v279 = vrot.slane %v224, 1
    %v280 = vsel %vm232, %v278, %v279
    %281 = vrot.lane.b32.xlu0 %v280, 127
    %v282 = vpop.permute.xlu0 %281
    %v284 = vadd.f32 %v275, %v282
    %285 = vst.msk [vmem:[#allocation4 + $0x20] sm:$0xff] %vm240, %v284
    %v286 = vld [vmem:[#allocation4 + $0x28] sm:$0xff]
    %v289 = vrot.slane %v227, 1
    %v290 = vrot.slane %v228, 1
    %v291 = vsel %vm232, %v289, %v290
    %292 = vrot.lane.b32.xlu0 %v291, 127
    %v293 = vpop.permute.xlu0 %292
    %v295 = vadd.f32 %v286, %v293
    %296 = vst.msk [vmem:[#allocation4 + $0x28] sm:$0xff] %vm240, %v295
    // Predicated region
    $region26: #{tpu_custom_call.1} parent=1 // pred_check
      %p297 = pneg %p36
    $region27: #{tpu_custom_call.1} parent=1 // pred_check_branch
      %299 = sbr.rel (%p297) target = $region29
    $region28: #{tpu_custom_call.1} parent=1 // pred_region
      %v300 = vlaneseq
      %v301 = vand.u32 %v300, 127
      %vm302 = vcmp.eq.s32.totalorder %v301, 0
      %v303 = vld [vmem:[#allocation4] sm:$0xff]
      %v304 = vsel %vm240, %v303, 0.0
      %305 = vadd.xlane.f32.xlu0 %v304
      %v306 = vpop.xlane.xlu0 %305
      %v307 = vrot.slane %v306, 4
      %v308 = vadd.f32 %v306, %v307
      %v309 = vrot.slane %v308, 2
      %v310 = vadd.f32 %v308, %v309
      %v311 = vrot.slane %v310, 1
      %v312 = vadd.f32 %v310, %v311
      %s313 = vtos %v312
      %v314 = vstv %s313
      %v315 = vsel %vm302, %v314, 0.0
      %vm316 = vcmp.eq.s32.totalorder %v301, 1
      %v317 = vld [vmem:[#allocation4 + $0x8] sm:$0xff]
      %v318 = vsel %vm240, %v317, 0.0
      %319 = vadd.xlane.f32.xlu0 %v318
      %v320 = vpop.xlane.xlu0 %319
      %v321 = vrot.slane %v320, 4
      %v322 = vadd.f32 %v320, %v321
      %v323 = vrot.slane %v322, 2
      %v324 = vadd.f32 %v322, %v323
      %v325 = vrot.slane %v324, 1
      %v326 = vadd.f32 %v324, %v325
      %s327 = vtos %v326
      %v328 = vstv %s327
      %v329 = vsel %vm316, %v328, 0.0
      %v330 = vadd.f32 %v315, %v329
      %vm331 = vcmp.eq.s32.totalorder %v301, 2
      %v332 = vld [vmem:[#allocation4 + $0x10] sm:$0xff]
      %v333 = vsel %vm240, %v332, 0.0
      %334 = vadd.xlane.f32.xlu0 %v333
      %v335 = vpop.xlane.xlu0 %334
      %v336 = vrot.slane %v335, 4
      %v337 = vadd.f32 %v335, %v336
      %v338 = vrot.slane %v337, 2
      %v339 = vadd.f32 %v337, %v338
      %v340 = vrot.slane %v339, 1
      %v341 = vadd.f32 %v339, %v340
      %s342 = vtos %v341
      %v343 = vstv %s342
      %v344 = vsel %vm331, %v343, 0.0
      %v345 = vadd.f32 %v330, %v344
      %vm346 = vcmp.eq.s32.totalorder %v301, 3
      %v347 = vld [vmem:[#allocation4 + $0x18] sm:$0xff]
      %v348 = vsel %vm240, %v347, 0.0
      %349 = vadd.xlane.f32.xlu0 %v348
      %v350 = vpop.xlane.xlu0 %349
      %v351 = vrot.slane %v350, 4
      %v352 = vadd.f32 %v350, %v351
      %v353 = vrot.slane %v352, 2
      %v354 = vadd.f32 %v352, %v353
      %v355 = vrot.slane %v354, 1
      %v356 = vadd.f32 %v354, %v355
      %s357 = vtos %v356
      %v358 = vstv %s357
      %v359 = vsel %vm346, %v358, 0.0
      %v360 = vadd.f32 %v345, %v359
      %vm361 = vcmp.eq.s32.totalorder %v301, 4
      %v362 = vld [vmem:[#allocation4 + $0x20] sm:$0xff]
      %v363 = vsel %vm240, %v362, 0.0
      %364 = vadd.xlane.f32.xlu0 %v363
      %v365 = vpop.xlane.xlu0 %364
      %v366 = vrot.slane %v365, 4
      %v367 = vadd.f32 %v365, %v366
      %v368 = vrot.slane %v367, 2
      %v369 = vadd.f32 %v367, %v368
      %v370 = vrot.slane %v369, 1
      %v371 = vadd.f32 %v369, %v370
      %s372 = vtos %v371
      %v373 = vstv %s372
      %v374 = vsel %vm361, %v373, 0.0
      %v375 = vadd.f32 %v360, %v374
      %vm376 = vcmp.eq.s32.totalorder %v301, 5
      %v377 = vld [vmem:[#allocation4 + $0x28] sm:$0xff]
      %v378 = vsel %vm240, %v377, 0.0
      %379 = vadd.xlane.f32.xlu0 %v378
      %v380 = vpop.xlane.xlu0 %379
      %v381 = vrot.slane %v380, 4
      %v382 = vadd.f32 %v380, %v381
      %v383 = vrot.slane %v382, 2
      %v384 = vadd.f32 %v382, %v383
      %v385 = vrot.slane %v384, 1
      %v386 = vadd.f32 %v384, %v385
      %s387 = vtos %v386
      %v388 = vstv %s387
      %v389 = vsel %vm376, %v388, 0.0
      %v390 = vadd.f32 %v375, %v389
      %391 = vst [vmem:[#allocation8] sm:$0xff] %v390
    $region29: #{tpu_custom_call.1} parent=1 // pred_fallthru
      _
    // Predicated region
    $region30: #{tpu_custom_call.1} parent=1 // pred_check
      _
    $region31: #{tpu_custom_call.1} parent=1 // pred_check_branch
      %393 = sbr.rel (0) target = $region33
    $region32: #{tpu_custom_call.1} parent=1 // pred_region
      %s395 = ssub.s32 128, 128
      %396 = vsyncadd [#allocation7], %s395
      %s398 = sshll.u32 [#allocation8], 4
      %s399 = int_to_ptr.vmem [resolvable:$true] %s398
      %401 = dma.vmem_to_hbm [thread:$0]  %s399, 128, %s2, [#allocation7]
    $region33: #{tpu_custom_call.1} parent=1 // pred_fallthru
      _
    // Predicated region
    $region34: #{tpu_custom_call.1} parent=1 // pred_check
      _
    $region35: #{tpu_custom_call.1} parent=1 // pred_check_branch
      %403 = sbr.rel (0) target = $region37
    $region36: #{tpu_custom_call.1} parent=1 // pred_region
      %404 = dma.done [#allocation7], 128
    $region37: #{tpu_custom_call.1} parent=1 // pred_fallthru
      _
    %405 = vsyncpa [#allocation6], 1
    %406 = vsyncpa [#allocation7], 1
  %407 = vsyncmov [#allocation3]
  %s408 = vpop.sfrf %407
  %p409 = scmp.eq.s32.totalorder %s408, 0
  %p410 = pneg %p409
  %412 = shalt.err (%p410)
  %s413 = scalar_lea.sflag [#allocation3], 1
  %414 = vsyncmov %s413
  %s415 = vpop.sfrf %414
  %p416 = scmp.eq.s32.totalorder %s415, 0
  %p417 = pneg %p416
  %419 = shalt.err (%p417)

</llo_original>
